<compile_context>
chip_gen: v7x
topology: tpu7x:2x2x1
jax: 0.10.0
libtpu: 0.0.40
codegen_flags: <defaults>
</compile_context>

<pallas_src>
import jax
import jax.numpy as jnp
from jax.experimental import pallas as pl
from jax.experimental.pallas import tpu as pltpu


_LANE_CANDIDATES = (4096, 2048, 1024, 512, 256, 128)
_TARGET_TILE_BYTES = 4 * 1024 * 1024   # per-buffer tile target (~5% step overhead)
_SPLIT2_BYTES = 1 * 1024 * 1024        # slabs >= this get >= 2 grid steps (v7x 2 TCs)
_SPLIT4_BYTES = 8 * 1024 * 1024        # slabs >= this get >= 4 grid steps
_VMEM_LIMIT_BYTES = 32 * 1024 * 1024   # <= ~48 MiB so it is safe on v7x (64 MiB VMEM)
_JNP_FALLBACK_ELEMS = 128              # below this a standalone kernel is pure overhead


def _sin_kernel(x_ref, o_ref):
    # Elementwise sin over the VMEM tile.  Not a single EUP op: lowers to
    # range reduction + polynomial on the VALU.  Single fused expression;
    # sub-f32 floats are evaluated in f32 and cast back at the store.
    o_ref[...] = jnp.sin(x_ref[...].astype(jnp.float32)).astype(o_ref.dtype)


def _sin_slab(slab, tile_rows, lane, grid_len, fuse_input):
    return pl.pallas_call(
        _sin_kernel,
        out_shape=jax.ShapeDtypeStruct(slab.shape, slab.dtype),
        grid_spec=pltpu.PrefetchScalarGridSpec(
            num_scalar_prefetch=0,
            grid=(grid_len,),
            in_specs=[pl.BlockSpec((tile_rows, lane), lambda i: (i, 0))],
            out_specs=pl.BlockSpec((tile_rows, lane), lambda i: (i, 0)),
        ),
        compiler_params=pltpu.CompilerParams(
            dimension_semantics=("parallel",),
            vmem_limit_bytes=_VMEM_LIMIT_BYTES,
            allow_input_fusion=[True] if fuse_input else None,
        ),
    )(slab)


def sin_act(x: jax.Array) -> jax.Array:
    """Pallas implementation of SinAct.forward: elementwise sin(x)."""
    orig_shape = x.shape
    dtype = x.dtype

    if not jnp.issubdtype(dtype, jnp.floating):
        # Integer inputs promote to float (matches torch/jnp); let XLA handle it.
        return jnp.sin(x)

    flat = x.reshape(-1)
    n = flat.shape[0]

    if n < _JNP_FALLBACK_ELEMS:
        # A standalone pallas_call forces an HBM round-trip XLA could fuse away.
        # In the full generator this threshold should be much higher (or sin
        # fused into the neighboring conv kernel); kept at 128 here so the demo
        # exercises the kernel.
        return jnp.sin(x)

    itemsize = jnp.dtype(dtype).itemsize
    # Sublane multiple for non-full-extent tiled blocks: 8 (f32), 16 (bf16/f16).
    sub_mult = max(8, (4 // max(1, itemsize)) * 8)

    # Aligned bulk (multiple of 128 lanes); ragged (<128) tail handled outside.
    n_main = (n // 128) * 128

    # Widest lane dim dividing the bulk while keeping >= sub_mult rows.
    lane = 128
    for cand in _LANE_CANDIDATES:
        if n_main % cand == 0 and (n_main // cand) >= sub_mult:
            lane = cand
            break
    rows = n_main // lane
    slab_bytes = n_main * itemsize

    if rows <= sub_mult:
        # Tiny slab: single full-extent block (exempt from (8,128) tiling).
        tile_rows = rows
    else:
        desired = max(sub_mult, _TARGET_TILE_BYTES // (lane * itemsize))
        desired = (desired // sub_mult) * sub_mult
        # Guarantee enough grid steps for the "parallel" axis to give both
        # v7x TensorCores balanced work (no effect on 1-TC v5e/v6e).
        if slab_bytes >= _SPLIT4_BYTES:
            min_steps = 4
        elif slab_bytes >= _SPLIT2_BYTES:
            min_steps = 2
        else:
            min_steps = 1
        cap = ((rows // min_steps) // sub_mult) * sub_mult
        tile_rows = max(sub_mult,
                        min(desired, cap, (rows // sub_mult) * sub_mult))

    grid_len = pl.cdiv(rows, tile_rows)

    if n_main == n:
        slab = flat.reshape(rows, lane)          # layout-preserving, no copy
        out = _sin_slab(slab, tile_rows, lane, grid_len, fuse_input=False)
        return out.reshape(orig_shape)

    # Ragged tail: aligned bulk through the kernel; allow_input_fusion lets XLA
    # fuse the leading slice into the kernel input instead of materializing a
    # full-size copy.
    # TODO(synk): the concatenate below still costs one extra HBM pass for
    # ragged sizes; a fully single-call path needs manual DMA over a raw HBM
    # ref and is not worth it for a <128-element tail.
    slab = flat[:n_main].reshape(rows, lane)
    out_main = _sin_slab(slab, tile_rows, lane, grid_len,
                         fuse_input=True).reshape(-1)
    out_tail = jnp.sin(flat[n_main:])
    return jnp.concatenate([out_main, out_tail]).reshape(orig_shape)


if __name__ == "__main__":
    sin_fn = jax.jit(sin_act)

    # Small NCHW activation consistent with SinAct's use inside the generator.
    x = jax.random.normal(jax.random.PRNGKey(0), (2, 4, 16, 16), dtype=jnp.float32)
    y = sin_fn(x)
    jax.block_until_ready(y)
    assert y.shape == x.shape and y.dtype == x.dtype
    assert jnp.allclose(y, jnp.sin(x), atol=1e-6, rtol=1e-6)

    # Ragged-tail path (n >= 128 but n % 128 != 0): bulk via kernel, tiny tail.
    x2 = jax.random.normal(jax.random.PRNGKey(1), (3, 67), dtype=jnp.float32)
    y2 = sin_fn(x2)
    jax.block_until_ready(y2)
    assert jnp.allclose(y2, jnp.sin(x2), atol=1e-6, rtol=1e-6)

    # bf16 path: upcast to f32 inside the kernel, store back as bf16.
    x3 = jax.random.normal(jax.random.PRNGKey(2), (4, 8, 32), dtype=jnp.bfloat16)
    y3 = sin_fn(x3)
    jax.block_until_ready(y3)
    assert y3.dtype == jnp.bfloat16
    assert jnp.allclose(y3.astype(jnp.float32),
                        jnp.sin(x3.astype(jnp.float32)), atol=2e-2, rtol=2e-2)

    print("KERNEL_OK")
</pallas_src>

<mosaic_0001>
module attributes {stable_mosaic.version = 11 : i64} {
  func.func @_sin_kernel(%arg0: i32, %arg1: memref<8x256xf32, #tpu.memory_space<vmem>>, %arg2: memref<8x256xf32, #tpu.memory_space<vmem>>) attributes {dimension_semantics = [#tpu.dimension_semantics<parallel>], iteration_bounds = array<i64: 1>, scalar_prefetch = 0 : i64, scratch_operands = 0 : i64, tpu.core_type = #tpu.core_type<tc>, window_params = [{transform_indices = @transform_0, window_bounds = array<i64: 8, 256>}, {transform_indices = @transform_1, window_bounds = array<i64: 8, 256>}]} {
    %c0 = arith.constant 0 : index
    %c0_0 = arith.constant 0 : index
    %0 = vector.load %arg1[%c0, %c0_0] : memref<8x256xf32, #tpu.memory_space<vmem>>, vector<8x256xf32>
    %1 = math.sin %0 : vector<8x256xf32>
    %c0_1 = arith.constant 0 : index
    %c0_2 = arith.constant 0 : index
    %2 = vector.load %arg2[%c0_1, %c0_2] : memref<8x256xf32, #tpu.memory_space<vmem>>, vector<8x256xf32>
    tpu.vector_store %arg2[%c0_1, %c0_2], %1 {strides = array<i32>} : memref<8x256xf32, #tpu.memory_space<vmem>>, vector<8x256xf32>,
    return
  }
  func.func @transform_0(%arg0: i32) -> (i32, i32) {
    %c0_i32 = arith.constant 0 : i32
    %c0_i32_0 = arith.constant 0 : i32
    return %arg0, %c0_i32 : i32, i32
  }
  func.func @transform_1(%arg0: i32) -> (i32, i32) {
    %c0_i32 = arith.constant 0 : i32
    %c0_i32_0 = arith.constant 0 : i32
    return %arg0, %c0_i32 : i32, i32
  }
}

</mosaic_0001>

<llo_original>
// kernel: sin_act.1
$region0: #{sin_act.1}
  #allocation0 [shape = 'u32[]', space=smem, size = 0x4, offset = 0x4, fixed_abs, tag = 'smem constant byte address 0x4 - core index']
  #allocation1 [shape = 'u32[144,128]{1,0:T(1,128)}', space=vmem, size = 0x12000, scoped, tag = 'internal scratch']
  %s0 = inlined_call_operand.vmem [shape: f32[8,256], index: 0, kind: input, shape index: {}]
  %s1 = inlined_call_operand.vmem [shape: f32[8,256], index: 1, kind: output, shape index: {}]
  %s2 = sld [smem:[#allocation0]]
  $region14: #{sin_act.1} parent=0
    _
  %s4 = ssub.s32 1, %s2
  %s5 = scalar_select 0, %s4, %s2
  // Predicated region
  $region2: #{sin_act.1} parent=0 // pred_check
    _
  $region3: #{sin_act.1} parent=0 // pred_check_branch
    %7 = sbr.rel (0) target = $region5
  $region4: #{sin_act.1} parent=0 // pred_region
    _
  $region5: #{sin_act.1} parent=0 // pred_fallthru
    _
  %v8 = vld [vmem:[%s0] sm:$0xff]
  %v9 = vld [vmem:[%s0 + $0x8] sm:$0xff]
  %v10 = vand.u32 2147483647, %v8
  %vm11 = vcmp.le.f32.partialorder %v10, 0.7853982
  %vm12 = vcmp.lt.s32.totalorder %v8, 0
  %v13 = vand.u32 %v8, 2139095040
  %v14 = vshrl.u32 %v13, 23
  %v15 = vsub.s32 %v14, 127
  %v16 = vand.u32 2147483647, %v8
  %v17 = vand.u32 %v16, 8388607
  %v18 = vor.u32 %v17, 8388608
  %v19 = vsub.s32 0, %v18
  %v20 = vadd.s32 %v15, 1
  %vm21 = vcmp.gt.s32.totalorder %v20, 0
  %v22 = vsel %vm21, %v20, 0
  %v23 = vshrl.u32 %v22, 5
  %v24 = vand.u32 %v22, 31
  %v25 = vsub.s32 32, %v24
  %v26 = vshrl.u32 683565275, %v25
  %v27 = vshll.u32 683565275, %v24
  %v28 = vshrl.u32 2475754826, %v25
  %v29 = vor.u32 %v27, %v28
  %v30 = vshll.u32 2475754826, %v24
  %v31 = vshrl.u32 2131351028, %v25
  %v32 = vor.u32 %v30, %v31
  %v33 = vshll.u32 2131351028, %v24
  %v34 = vshrl.u32 2102212464, %v25
  %v35 = vor.u32 %v33, %v34
  %v36 = vshll.u32 2102212464, %v24
  %v37 = vshrl.u32 920167782, %v25
  %v38 = vor.u32 %v36, %v37
  %v39 = vshll.u32 920167782, %v24
  %v40 = vshrl.u32 1326507024, %v25
  %v41 = vor.u32 %v39, %v40
  %vm42 = vcmp.lt.s32.totalorder %v23, 1
  %vm43 = vcmp.lt.s32.totalorder %v23, 2
  %vm44 = vcmp.lt.s32.totalorder %v23, 3
  %vm45 = vcmp.lt.s32.totalorder %v23, 4
  %v46 = vsel %vm42, %v26, %v29
  %v47 = vsel %vm45, %v35, 2102212464
  %v48 = vsel %vm44, %v32, %v47
  %v49 = vsel %vm43, %v46, %v48
  %v50 = vsel %vm42, %v29, %v32
  %v51 = vsel %vm45, %v38, 920167782
  %v52 = vsel %vm44, %v35, %v51
  %v53 = vsel %vm43, %v50, %v52
  %v54 = vsel %vm42, %v32, %v35
  %v55 = vsel %vm45, %v41, 1326507024
  %v56 = vsel %vm44, %v38, %v55
  %v57 = vsel %vm43, %v54, %v56
  %v58 = vshll.u32 %v18, 8
  %v59 = vmul.u32.u64.compose %v58, %v57
  %v60 = vextract.low.u32 %v59
  %v61 = vextract.high.u32 %v59
  %v62 = vmul.u32.u64.compose %v58, %v53
  %v63 = vextract.low.u32 %v62
  %v64 = vextract.high.u32 %v62
  %v65 = vmul.u32 %v58, %v49
  %v66 = vadd.s32 %v61, %v63
  %vm67 = vc.u32 %v61, %v63
  %v68 = vadd.s32 %v64, 1
  %v69 = vsel %vm67, %v68, %v64
  %v70 = vadd.s32 %v65, %v69
  %v71 = vadd.s32 %v70, 536870912
  %v72 = vshrl.u32 %v71, 30
  %v73 = vshll.u32 %v72, 30
  %v74 = vsub.s32 %v70, %v73
  %vm75 = vcmp.lt.s32.totalorder %v74, 0
  %v76 = vsub.s32 0, %v74
  %v77 = vsel %vm75, %v76, %v74
  %v78 = vclz %v77
  %v79 = vsub.s32 %v78, 2
  %vm80 = vcmp.gt.s32.totalorder 0, %v79
  %v81 = vsel %vm80, 0, %v79
  %v82 = vsub.s32 32, %v81
  %v83 = vshll.u32 %v74, %v81
  %v84 = vshrl.u32 %v66, %v82
  %v85 = vor.u32 %v83, %v84
  %v86 = vsub.s32 4294967266, %v81
  %v87 = vadd.s32 %v86, 127
  %v88 = vshll.u32 %v87, 23
  %v89 = vor.u32 4788187, %v88
  %v90 = vand.u32 2147483647, %v89
  %v92 = vcvt.s32.f32 %v85
  %v93 = vmul.f32 %v92, %v90
  %v94 = vxor.u32 %v93, 2147483648
  %v95 = vsel %vm12, %v94, %v93
  %v96 = vsub.s32 4, %v72
  %v97 = vsel %vm12, %v96, %v72
  %v98 = vsel %vm11, %v8, %v95
  %v99 = vsel %vm11, 0, %v97
  %v100 = vcosq.f32.pop %v98
  %v101 = vsinq.f32.pop %v98
  %vm102 = vweird.f32 %v8
  %v103 = vadd.s32 %v99, 3
  %v104 = vand.u32 %v103, 3
  %vm105 = vcmp.lt.s32.totalorder %v104, 2
  %vm106 = vcmp.eq.s32.totalorder %v104, 0
  %v107 = vxor.u32 %v101, 2147483648
  %v108 = vsel %vm106, %v100, %v107
  %vm109 = vcmp.eq.s32.totalorder %v104, 2
  %v110 = vxor.u32 %v100, 2147483648
  %v111 = vsel %vm109, %v110, %v101
  %v112 = vsel %vm105, %v108, %v111
  %v113 = vsel %vm102, nan, %v112
  %v114 = vand.u32 2147483647, %v9
  %vm115 = vcmp.le.f32.partialorder %v114, 0.7853982
  %vm116 = vcmp.lt.s32.totalorder %v9, 0
  %v117 = vand.u32 %v9, 2139095040
  %v118 = vshrl.u32 %v117, 23
  %v119 = vsub.s32 %v118, 127
  %v120 = vand.u32 2147483647, %v9
  %v121 = vand.u32 %v120, 8388607
  %v122 = vor.u32 %v121, 8388608
  %v123 = vsub.s32 0, %v122
  %v124 = vadd.s32 %v119, 1
  %vm125 = vcmp.gt.s32.totalorder %v124, 0
  %v126 = vsel %vm125, %v124, 0
  %v127 = vshrl.u32 %v126, 5
  %v128 = vand.u32 %v126, 31
  %v129 = vsub.s32 32, %v128
  %v130 = vshrl.u32 683565275, %v129
  %v131 = vshll.u32 683565275, %v128
  %v132 = vshrl.u32 2475754826, %v129
  %v133 = vor.u32 %v131, %v132
  %v134 = vshll.u32 2475754826, %v128
  %v135 = vshrl.u32 2131351028, %v129
  %v136 = vor.u32 %v134, %v135
  %v137 = vshll.u32 2131351028, %v128
  %v138 = vshrl.u32 2102212464, %v129
  %v139 = vor.u32 %v137, %v138
  %v140 = vshll.u32 2102212464, %v128
  %v141 = vshrl.u32 920167782, %v129
  %v142 = vor.u32 %v140, %v141
  %v143 = vshll.u32 920167782, %v128
  %v144 = vshrl.u32 1326507024, %v129
  %v145 = vor.u32 %v143, %v144
  %vm146 = vcmp.lt.s32.totalorder %v127, 1
  %vm147 = vcmp.lt.s32.totalorder %v127, 2
  %vm148 = vcmp.lt.s32.totalorder %v127, 3
  %vm149 = vcmp.lt.s32.totalorder %v127, 4
  %v150 = vsel %vm146, %v130, %v133
  %v151 = vsel %vm149, %v139, 2102212464
  %v152 = vsel %vm148, %v136, %v151
  %v153 = vsel %vm147, %v150, %v152
  %v154 = vsel %vm146, %v133, %v136
  %v155 = vsel %vm149, %v142, 920167782
  %v156 = vsel %vm148, %v139, %v155
  %v157 = vsel %vm147, %v154, %v156
  %v158 = vsel %vm146, %v136, %v139
  %v159 = vsel %vm149, %v145, 1326507024
  %v160 = vsel %vm148, %v142, %v159
  %v161 = vsel %vm147, %v158, %v160
  %v162 = vshll.u32 %v122, 8
  %v163 = vmul.u32.u64.compose %v162, %v161
  %v164 = vextract.low.u32 %v163
  %v165 = vextract.high.u32 %v163
  %v166 = vmul.u32.u64.compose %v162, %v157
  %v167 = vextract.low.u32 %v166
  %v168 = vextract.high.u32 %v166
  %v169 = vmul.u32 %v162, %v153
  %v170 = vadd.s32 %v165, %v167
  %vm171 = vc.u32 %v165, %v167
  %v172 = vadd.s32 %v168, 1
  %v173 = vsel %vm171, %v172, %v168
  %v174 = vadd.s32 %v169, %v173
  %v175 = vadd.s32 %v174, 536870912
  %v176 = vshrl.u32 %v175, 30
  %v177 = vshll.u32 %v176, 30
  %v178 = vsub.s32 %v174, %v177
  %vm179 = vcmp.lt.s32.totalorder %v178, 0
  %v180 = vsub.s32 0, %v178
  %v181 = vsel %vm179, %v180, %v178
  %v182 = vclz %v181
  %v183 = vsub.s32 %v182, 2
  %vm184 = vcmp.gt.s32.totalorder 0, %v183
  %v185 = vsel %vm184, 0, %v183
  %v186 = vsub.s32 32, %v185
  %v187 = vshll.u32 %v178, %v185
  %v188 = vshrl.u32 %v170, %v186
  %v189 = vor.u32 %v187, %v188
  %v190 = vsub.s32 4294967266, %v185
  %v191 = vadd.s32 %v190, 127
  %v192 = vshll.u32 %v191, 23
  %v193 = vor.u32 4788187, %v192
  %v194 = vand.u32 2147483647, %v193
  %v196 = vcvt.s32.f32 %v189
  %v197 = vmul.f32 %v196, %v194
  %v198 = vxor.u32 %v197, 2147483648
  %v199 = vsel %vm116, %v198, %v197
  %v200 = vsub.s32 4, %v176
  %v201 = vsel %vm116, %v200, %v176
  %v202 = vsel %vm115, %v9, %v199
  %v203 = vsel %vm115, 0, %v201
  %v204 = vcosq.f32.pop %v202
  %v205 = vsinq.f32.pop %v202
  %vm206 = vweird.f32 %v9
  %v207 = vadd.s32 %v203, 3
  %v208 = vand.u32 %v207, 3
  %vm209 = vcmp.lt.s32.totalorder %v208, 2
  %vm210 = vcmp.eq.s32.totalorder %v208, 0
  %v211 = vxor.u32 %v205, 2147483648
  %v212 = vsel %vm210, %v204, %v211
  %vm213 = vcmp.eq.s32.totalorder %v208, 2
  %v214 = vxor.u32 %v204, 2147483648
  %v215 = vsel %vm213, %v214, %v205
  %v216 = vsel %vm209, %v212, %v215
  %v217 = vsel %vm206, nan, %v216
  %218 = vst [vmem:[%s1] sm:$0xff] %v113
  %219 = vst [vmem:[%s1 + $0x8] sm:$0xff] %v217
  // Predicated region
  $region6: #{sin_act.1} parent=0 // pred_check
    _
  $region7: #{sin_act.1} parent=0 // pred_check_branch
    %221 = sbr.rel (0) target = $region9
  $region8: #{sin_act.1} parent=0 // pred_region
    _
  $region9: #{sin_act.1} parent=0 // pred_fallthru
    _
  // Predicated region
  $region10: #{sin_act.1} parent=0 // pred_check
    _
  $region11: #{sin_act.1} parent=0 // pred_check_branch
    %223 = sbr.rel (0) target = $region13
  $region12: #{sin_act.1} parent=0 // pred_region
    _
  $region13: #{sin_act.1} parent=0 // pred_fallthru
    _

</llo_original>
